<compile_context>
chip_gen: v5e
topology: v5e:2x2
jax: 0.10.0
libtpu: 0.0.40
codegen_flags: <defaults>
</compile_context>

<pallas_src>
import math

import numpy as np
import jax
import jax.numpy as jnp
from jax.experimental import pallas as pl
from jax.experimental.pallas import tpu as pltpu

_ALPHA = 0.25
_GAMMA = 2                                   # integer power, matches torch default
_THRESH = 1e-4                               # CenternessLoss clamp threshold
_CNT_LOGIT_CLAMP = math.log((1.0 - _THRESH) / _THRESH)   # logit(1 - 1e-4) ~ 9.21024
_IOU_EPS = 1e-6
_CLS_PAD_LOGIT = -40.0                       # padded pred-class logit -> 0 focal term
_BC_ROWS = 11            # p_l,p_t,p_r,p_b,p_cntr, t_l,t_t,t_r,t_b,t_cntr, pos_mask
_N_CORE_SPLIT = 2        # leading "parallel" grid axis (v7x megacore; serial elsewhere)
_VMEM_BUDGET = 24 * 1024 * 1024              # keep well inside v7x's 32 MiB scoped VMEM


def _fcos_loss_kernel(pc_ref, tc_ref, bc_ref, out_ref):
    @pl.when(pl.program_id(1) == 0)
    def _init():
        out_ref[...] = jnp.zeros_like(out_ref)

    # ---- Focal (classification) loss: lane-packed (tile_m*C/128, 128) tile ----
    x = pc_ref[...].astype(jnp.float32)                  # logits
    t = tc_ref[...].astype(jnp.float32)                  # one-hot targets in {0, 1}

    e = jnp.exp(-jnp.abs(x))                             # EUP exp
    lp = jnp.log(1.0 + e)                                # EUP log: softplus(-|x|)
    inv = pl.reciprocal(1.0 + e, approx=True)            # EUP vrcp: sigmoid(|x|)
    x_pos = x >= 0.0
    sig_c = e * inv                                      # sigmoid(-|x|) = 1 - sigmoid(|x|)
    p = jnp.where(x_pos, inv, sig_c)                     # sigmoid(x)
    q = jnp.where(x_pos, sig_c, inv)                     # 1 - sigmoid(x), no cancellation
    one_minus_pt = jnp.where(t == 1.0, q, p)
    # Stable BCE-with-logits: softplus(-|x|) + max(x, 0) - x*t.
    ce = lp + x * (x_pos.astype(jnp.float32) - t)
    alpha_t = 0.75 - 0.5 * t                             # t*alpha + (1-t)*(1-alpha)
    focal = alpha_t * (one_minus_pt * one_minus_pt) * ce     # gamma == 2

    # ---- Boxes / centerness / positive mask: lane-dense (11, tile_m/128, 128) ----
    bc = bc_ref[...]
    p_l, p_t, p_r, p_b, p_cn = bc[0], bc[1], bc[2], bc[3], bc[4]
    t_l, t_t, t_r, t_b, t_cn, pos_f = bc[5], bc[6], bc[7], bc[8], bc[9], bc[10]
    pos = pos_f > 0.0

    # Centerness BCE in clamped-logit form (== sigmoid + clamp + BCE of the module).
    xc = jnp.clip(p_cn, -_CNT_LOGIT_CLAMP, _CNT_LOGIT_CLAMP)
    tcn = jnp.clip(t_cn, _THRESH, 1.0 - _THRESH)
    softplus = jnp.log(1.0 + jnp.exp(-jnp.abs(xc))) + jnp.maximum(xc, 0.0)
    bce = jnp.where(pos, softplus - tcn * xc, 0.0)

    # IoU (regression) loss over positive locations.
    inter = ((jnp.minimum(p_r, t_r) + jnp.minimum(p_l, t_l)) *
             (jnp.minimum(p_b, t_b) + jnp.minimum(p_t, t_t)))
    union = (p_r + p_l) * (p_b + p_t) + (t_r + t_l) * (t_b + t_t) - inter
    iou = inter * pl.reciprocal(union + _IOU_EPS, approx=True)
    iou = jnp.where(pos, iou, 1.0)                       # masked rows: -log(1) == 0
    regr = -jnp.log(iou)

    # ---- Lane-wise partial sums accumulated into this core's output block ----
    out_ref[0, 0:1, :] += jnp.sum(focal, axis=0, keepdims=True)
    out_ref[0, 1:2, :] += jnp.sum(bce, axis=0, keepdims=True)
    out_ref[0, 2:3, :] += jnp.sum(regr, axis=0, keepdims=True)
    out_ref[0, 3:4, :] += jnp.sum(pos_f, axis=0, keepdims=True)


def _round_up(x, m):
    return (x + m - 1) // m * m


def _cdiv(a, b):
    return (a + b - 1) // b


def _choose_tiling(m, classes, cls_bytes):
    """Pick (tile_m, steps_per_core) under the VMEM budget while minimizing padding."""
    # Rough per-location footprint: double-buffered inputs (2 class tensors + the
    # 11-row f32 box slab) plus live f32 temporaries (~8 per class element for the
    # focal chain, ~12 per location for the box/centerness chain).
    per_loc = 2 * (2 * classes * cls_bytes + _BC_ROWS * 4) + 8 * classes * 4 + 12 * 4
    cap = max(1024, _VMEM_BUDGET // per_loc)
    target = max(1024, (512 * 1024) // max(1, classes * cls_bytes))  # ~512 KiB cls block
    tile = min(target, cap, max(1024, _round_up(m, 2 * 1024) // _N_CORE_SPLIT))
    tile = max(1024, tile // 1024 * 1024)
    steps = max(1, _cdiv(m, _N_CORE_SPLIT * tile))                   # tiles per core
    tile = _round_up(_cdiv(m, _N_CORE_SPLIT * steps), 1024)          # rebalance padding
    return tile, steps


def fcos_loss(pred, target, aggregator='sum', tile_m=None):
    # TODO(synk): only the default aggregator='sum' is supported (mask-and-sum replaces
    # the boolean gather; other torch aggregators are not implemented).
    assert aggregator == 'sum'
    classes = target['classes'].shape[-1]

    # Class tensors keep their native dtype through the DMA (upcast in-kernel).
    pc = jnp.reshape(pred['classes'], (-1, classes))
    tc = jnp.reshape(target['classes'], (-1, classes))
    pb = jnp.reshape(pred['boxes'], (-1, 4)).astype(jnp.float32)
    tb = jnp.reshape(target['boxes'], (-1, 4)).astype(jnp.float32)
    pcn = jnp.reshape(pred['centerness'], (-1, 1)).astype(jnp.float32)
    tcn = jnp.reshape(target['centerness'], (-1, 1)).astype(jnp.float32)

    m = pc.shape[0]
    cls_bytes = pc.dtype.itemsize

    if tile_m is None:
        tile_m, steps = _choose_tiling(m, classes, cls_bytes)
    else:
        assert tile_m % 1024 == 0
        steps = max(1, _cdiv(m, _N_CORE_SPLIT * tile_m))

    m_pad = _N_CORE_SPLIT * steps * tile_m
    pad = m_pad - m
    cls_rows = tile_m * classes // 128

    # Lane-packed class tensors (the focal term is purely elementwise, so the exact
    # (M, C) -> (M*C/128, 128) repack does not change semantics).
    def _pack_classes(x, pad_value):
        x = jnp.reshape(x, (-1,))
        if pad:
            x = jnp.pad(x, (0, pad * classes), constant_values=pad_value)
        return jnp.reshape(x, (m_pad * classes // 128, 128))

    pc_packed = _pack_classes(pc, _CLS_PAD_LOGIT)
    tc_packed = _pack_classes(tc, 0.0)

    # TODO(synk): the positive mask could be produced by the target encoder upstream to
    # avoid this extra wrapper pass over target['classes'] (matters most on v5e).
    pos = (jnp.sum(tc.astype(jnp.float32), axis=-1) > 0.0).astype(jnp.float32)

    # One merged lane-dense slab: rows 0-4 pred (l,t,r,b,cntr-logit), rows 5-9 target
    # (l,t,r,b,cntr), row 10 positive mask.  Shape (11, M/128, 128) -> single DMA per
    # step and full (8,128) vreg occupancy for the IoU / centerness math.
    bc = jnp.concatenate([pb, pcn, tb, tcn, pos[:, None]], axis=-1).T       # (11, M)
    if pad:
        bc = jnp.pad(bc, ((0, 0), (0, pad)))
    bc = jnp.reshape(bc, (_BC_ROWS, m_pad // 128, 128))

    partial = pl.pallas_call(
        _fcos_loss_kernel,
        out_shape=jax.ShapeDtypeStruct((_N_CORE_SPLIT, 4, 128), jnp.float32),
        grid_spec=pltpu.PrefetchScalarGridSpec(
            num_scalar_prefetch=0,
            grid=(_N_CORE_SPLIT, steps),
            in_specs=[
                pl.BlockSpec((cls_rows, 128), lambda c, i: (c * steps + i, 0)),
                pl.BlockSpec((cls_rows, 128), lambda c, i: (c * steps + i, 0)),
                pl.BlockSpec((_BC_ROWS, tile_m // 128, 128),
                             lambda c, i: (0, c * steps + i, 0)),
            ],
            out_specs=pl.BlockSpec((1, 4, 128), lambda c, i: (c, 0, 0)),
        ),
        compiler_params=pltpu.CompilerParams(
            dimension_semantics=("parallel", "arbitrary"),
            vmem_limit_bytes=32 * 1024 * 1024,
        ),
    )(pc_packed, tc_packed, bc)

    sums = jnp.sum(partial, axis=(0, 2))     # [focal, centerness, regression, n_pos]
    # TODO(synk): torch asserts n_pos > 0 (a host sync); guard instead of syncing.
    pos_cnt = jnp.maximum(sums[3], 1.0)
    class_loss = sums[0] / pos_cnt
    centerness_loss = sums[1] / pos_cnt
    regression_loss = sums[2] / pos_cnt
    total_loss = class_loss + centerness_loss + regression_loss

    # Device scalars are returned (torch returns .cpu().numpy() for the components;
    # that host sync is intentionally avoided here).
    return {
        'total': total_loss,
        'classification': class_loss,
        'centerness': centerness_loss,
        'regression': regression_loss,
    }


def _fcos_loss_ref(pred, target):
    """Pure-jnp reference mirroring the PyTorch module's math (sum aggregator)."""
    classes = target['classes'].shape[-1]
    tc = jnp.reshape(target['classes'], (-1, classes)).astype(jnp.float32)
    tb = jnp.reshape(target['boxes'], (-1, 4)).astype(jnp.float32)
    tcn = jnp.reshape(target['centerness'], (-1, 1)).astype(jnp.float32)
    pc = jax.nn.sigmoid(jnp.reshape(pred['classes'], (-1, classes)).astype(jnp.float32))
    pb = jnp.reshape(pred['boxes'], (-1, 4)).astype(jnp.float32)
    pcn = jax.nn.sigmoid(jnp.reshape(pred['centerness'], (-1, 1)).astype(jnp.float32))

    ce = -(tc * jnp.log(pc) + (1.0 - tc) * jnp.log(1.0 - pc))
    alpha = tc * _ALPHA + (1.0 - tc) * (1.0 - _ALPHA)
    pt = jnp.where(tc == 1.0, pc, 1.0 - pc)
    focal = alpha * (1.0 - pt) ** _GAMMA * ce

    pos = jnp.sum(tc, axis=-1) > 0.0
    cnt = jnp.sum(pos.astype(jnp.float32))

    pcn_c = jnp.clip(pcn, _THRESH, 1.0 - _THRESH)
    tcn_c = jnp.clip(tcn, _THRESH, 1.0 - _THRESH)
    bce = -(tcn_c * jnp.log(pcn_c) + (1.0 - tcn_c) * jnp.log(1.0 - pcn_c))

    p_l, p_t, p_r, p_b = pb[:, 0], pb[:, 1], pb[:, 2], pb[:, 3]
    t_l, t_t, t_r, t_b = tb[:, 0], tb[:, 1], tb[:, 2], tb[:, 3]
    inter = ((jnp.minimum(p_r, t_r) + jnp.minimum(p_l, t_l)) *
             (jnp.minimum(p_b, t_b) + jnp.minimum(p_t, t_t)))
    union = (p_r + p_l) * (p_b + p_t) + (t_r + t_l) * (t_b + t_t) - inter
    regr = -jnp.log(inter / (union + _IOU_EPS))

    class_loss = jnp.sum(focal) / cnt
    cntr_loss = jnp.sum(jnp.where(pos[:, None], bce, 0.0)) / cnt
    regr_loss = jnp.sum(jnp.where(pos, regr, 0.0)) / cnt
    return {'total': class_loss + cntr_loss + regr_loss,
            'classification': class_loss,
            'centerness': cntr_loss,
            'regression': regr_loss}


if __name__ == "__main__":
    key = jax.random.PRNGKey(0)
    B, N, C = 2, 2048, 8     # M = B*N = 4096 flattened locations (e.g. a 64x32 map)

    (k_mask, k_cls, k_plogit, k_tbox, k_pbox,
     k_tcntr, k_pcntr) = jax.random.split(key, 7)

    # Targets: ~30% of locations positive (one-hot class), rest all-zero.
    pos_mask = (jax.random.uniform(k_mask, (B, N)) < 0.3).astype(jnp.float32)
    cls_idx = jax.random.randint(k_cls, (B, N), 0, C)
    target_classes = jax.nn.one_hot(cls_idx, C, dtype=jnp.float32) * pos_mask[..., None]
    target_boxes = jax.random.uniform(k_tbox, (B, N, 4), minval=0.5, maxval=2.0)
    target_centerness = jax.random.uniform(k_tcntr, (B, N, 1), minval=0.05, maxval=0.95)

    # Predictions: class/centerness are raw logits, boxes are positive distances.
    pred_classes = jax.random.normal(k_plogit, (B, N, C), dtype=jnp.float32)
    pred_boxes = jax.random.uniform(k_pbox, (B, N, 4), minval=0.5, maxval=2.0)
    pred_centerness = jax.random.normal(k_pcntr, (B, N, 1), dtype=jnp.float32)

    pred = {'classes': pred_classes, 'boxes': pred_boxes, 'centerness': pred_centerness}
    target = {'classes': target_classes, 'boxes': target_boxes,
              'centerness': target_centerness}

    out = fcos_loss(pred, target)                       # default tiling -> grid (2, 1)
    out_small = fcos_loss(pred, target, tile_m=1024)    # grid (2, 2): accumulator path
    jax.block_until_ready(out['total'])
    jax.block_until_ready(out_small['total'])

    ref = _fcos_loss_ref(pred, target)
    for name in ('total', 'classification', 'centerness', 'regression'):
        np.testing.assert_allclose(float(out[name]), float(ref[name]),
                                   rtol=2e-3, atol=1e-5)
        np.testing.assert_allclose(float(out_small[name]), float(ref[name]),
                                   rtol=2e-3, atol=1e-5)
    assert np.isfinite(float(out['total']))
    print("KERNEL_OK")
</pallas_src>

<mosaic_0001>
module attributes {stable_mosaic.version = 11 : i64} {
  func.func @_fcos_loss_kernel(%arg0: i32, %arg1: i32, %arg2: memref<128x128xf32, #tpu.memory_space<vmem>>, %arg3: memref<128x128xf32, #tpu.memory_space<vmem>>, %arg4: memref<11x16x128xf32, #tpu.memory_space<vmem>>, %arg5: memref<1x4x128xf32, #tpu.memory_space<vmem>>) attributes {dimension_semantics = [#tpu.dimension_semantics<parallel>, #tpu.dimension_semantics<arbitrary>], iteration_bounds = array<i64: 2, 1>, scalar_prefetch = 0 : i64, scratch_operands = 0 : i64, tpu.core_type = #tpu.core_type<tc>, window_params = [{transform_indices = @transform_0, window_bounds = array<i64: 128, 128>}, {transform_indices = @transform_1, window_bounds = array<i64: 128, 128>}, {transform_indices = @transform_2, window_bounds = array<i64: 11, 16, 128>}, {transform_indices = @transform_3, window_bounds = array<i64: 1, 4, 128>}]} {
    %c0_i32 = arith.constant 0 : i32
    %0 = arith.cmpi eq, %arg1, %c0_i32 : i32
    %1 = arith.extui %0 : i1 to i32
    %c0_i32_0 = arith.constant 0 : i32
    %2 = arith.cmpi ne, %1, %c0_i32_0 : i32
    scf.if %2 {
      %cst_50 = arith.constant 0.000000e+00 : f32
      %138 = vector.broadcast %cst_50 : f32 to vector<1x4x128xf32>
      %c0_51 = arith.constant 0 : index
      %c0_52 = arith.constant 0 : index
      %c0_53 = arith.constant 0 : index
      %139 = vector.load %arg5[%c0_51, %c0_52, %c0_53] : memref<1x4x128xf32, #tpu.memory_space<vmem>>, vector<1x4x128xf32>
      tpu.vector_store %arg5[%c0_51, %c0_52, %c0_53], %138 {strides = array<i32>} : memref<1x4x128xf32, #tpu.memory_space<vmem>>, vector<1x4x128xf32>,
    } else {
    }
    %c0 = arith.constant 0 : index
    %c0_1 = arith.constant 0 : index
    %3 = vector.load %arg2[%c0, %c0_1] : memref<128x128xf32, #tpu.memory_space<vmem>>, vector<128x128xf32>
    %c0_2 = arith.constant 0 : index
    %c0_3 = arith.constant 0 : index
    %4 = vector.load %arg3[%c0_2, %c0_3] : memref<128x128xf32, #tpu.memory_space<vmem>>, vector<128x128xf32>
    %5 = math.absf %3 : vector<128x128xf32>
    %cst = arith.constant 0.000000e+00 : f32
    %6 = vector.broadcast %cst : f32 to vector<128x128xf32>
    %7 = arith.subf %6, %5 : vector<128x128xf32>
    %8 = math.exp %7 : vector<128x128xf32>
    %cst_4 = arith.constant 1.000000e+00 : f32
    %9 = vector.broadcast %cst_4 : f32 to vector<128x128xf32>
    %10 = arith.addf %9, %8 : vector<128x128xf32>
    %11 = math.log %10 : vector<128x128xf32>
    %cst_5 = arith.constant 1.000000e+00 : f32
    %12 = vector.broadcast %cst_5 : f32 to vector<128x128xf32>
    %13 = arith.addf %12, %8 : vector<128x128xf32>
    %14 = tpu.reciprocal %13 {approx = true} : vector<128x128xf32> -> vector<128x128xf32>
    %cst_6 = arith.constant 0.000000e+00 : f32
    %15 = vector.broadcast %cst_6 : f32 to vector<128x128xf32>
    %16 = arith.cmpf oge, %3, %15 : vector<128x128xf32>
    %17 = arith.mulf %8, %14 : vector<128x128xf32>
    %18 = arith.select %16, %14, %17 : vector<128x128xi1>, vector<128x128xf32>
    %19 = arith.select %16, %17, %14 : vector<128x128xi1>, vector<128x128xf32>
    %cst_7 = arith.constant 1.000000e+00 : f32
    %20 = vector.broadcast %cst_7 : f32 to vector<128x128xf32>
    %21 = arith.cmpf oeq, %4, %20 : vector<128x128xf32>
    %22 = arith.select %21, %19, %18 : vector<128x128xi1>, vector<128x128xf32>
    %23 = arith.extui %16 : vector<128x128xi1> to vector<128x128xi32>
    %24 = arith.sitofp %23 : vector<128x128xi32> to vector<128x128xf32>
    %25 = arith.subf %24, %4 : vector<128x128xf32>
    %26 = arith.mulf %3, %25 : vector<128x128xf32>
    %27 = arith.addf %11, %26 : vector<128x128xf32>
    %cst_8 = arith.constant 5.000000e-01 : f32
    %28 = vector.broadcast %cst_8 : f32 to vector<128x128xf32>
    %29 = arith.mulf %28, %4 : vector<128x128xf32>
    %cst_9 = arith.constant 7.500000e-01 : f32
    %30 = vector.broadcast %cst_9 : f32 to vector<128x128xf32>
    %31 = arith.subf %30, %29 : vector<128x128xf32>
    %32 = arith.mulf %22, %22 : vector<128x128xf32>
    %33 = arith.mulf %31, %32 : vector<128x128xf32>
    %34 = arith.mulf %33, %27 : vector<128x128xf32>
    %c0_10 = arith.constant 0 : index
    %c0_11 = arith.constant 0 : index
    %c0_12 = arith.constant 0 : index
    %35 = vector.load %arg4[%c0_10, %c0_11, %c0_12] : memref<11x16x128xf32, #tpu.memory_space<vmem>>, vector<11x16x128xf32>
    %36 = vector.extract_strided_slice %35 {offsets = [0, 0, 0], sizes = [1, 16, 128], strides = [1, 1, 1]} : vector<11x16x128xf32> to vector<1x16x128xf32>
    %37 = vector.shape_cast %36 : vector<1x16x128xf32> to vector<16x128xf32>
    %38 = vector.extract_strided_slice %35 {offsets = [1, 0, 0], sizes = [1, 16, 128], strides = [1, 1, 1]} : vector<11x16x128xf32> to vector<1x16x128xf32>
    %39 = vector.shape_cast %38 : vector<1x16x128xf32> to vector<16x128xf32>
    %40 = vector.extract_strided_slice %35 {offsets = [2, 0, 0], sizes = [1, 16, 128], strides = [1, 1, 1]} : vector<11x16x128xf32> to vector<1x16x128xf32>
    %41 = vector.shape_cast %40 : vector<1x16x128xf32> to vector<16x128xf32>
    %42 = vector.extract_strided_slice %35 {offsets = [3, 0, 0], sizes = [1, 16, 128], strides = [1, 1, 1]} : vector<11x16x128xf32> to vector<1x16x128xf32>
    %43 = vector.shape_cast %42 : vector<1x16x128xf32> to vector<16x128xf32>
    %44 = vector.extract_strided_slice %35 {offsets = [4, 0, 0], sizes = [1, 16, 128], strides = [1, 1, 1]} : vector<11x16x128xf32> to vector<1x16x128xf32>
    %45 = vector.shape_cast %44 : vector<1x16x128xf32> to vector<16x128xf32>
    %46 = vector.extract_strided_slice %35 {offsets = [5, 0, 0], sizes = [1, 16, 128], strides = [1, 1, 1]} : vector<11x16x128xf32> to vector<1x16x128xf32>
    %47 = vector.shape_cast %46 : vector<1x16x128xf32> to vector<16x128xf32>
    %48 = vector.extract_strided_slice %35 {offsets = [6, 0, 0], sizes = [1, 16, 128], strides = [1, 1, 1]} : vector<11x16x128xf32> to vector<1x16x128xf32>
    %49 = vector.shape_cast %48 : vector<1x16x128xf32> to vector<16x128xf32>
    %50 = vector.extract_strided_slice %35 {offsets = [7, 0, 0], sizes = [1, 16, 128], strides = [1, 1, 1]} : vector<11x16x128xf32> to vector<1x16x128xf32>
    %51 = vector.shape_cast %50 : vector<1x16x128xf32> to vector<16x128xf32>
    %52 = vector.extract_strided_slice %35 {offsets = [8, 0, 0], sizes = [1, 16, 128], strides = [1, 1, 1]} : vector<11x16x128xf32> to vector<1x16x128xf32>
    %53 = vector.shape_cast %52 : vector<1x16x128xf32> to vector<16x128xf32>
    %54 = vector.extract_strided_slice %35 {offsets = [9, 0, 0], sizes = [1, 16, 128], strides = [1, 1, 1]} : vector<11x16x128xf32> to vector<1x16x128xf32>
    %55 = vector.shape_cast %54 : vector<1x16x128xf32> to vector<16x128xf32>
    %56 = vector.extract_strided_slice %35 {offsets = [10, 0, 0], sizes = [1, 16, 128], strides = [1, 1, 1]} : vector<11x16x128xf32> to vector<1x16x128xf32>
    %57 = vector.shape_cast %56 : vector<1x16x128xf32> to vector<16x128xf32>
    %cst_13 = arith.constant 0.000000e+00 : f32
    %58 = vector.broadcast %cst_13 : f32 to vector<16x128xf32>
    %59 = arith.cmpf ogt, %57, %58 : vector<16x128xf32>
    %cst_14 = arith.constant -9.210240e+00 : f32
    %cst_15 = arith.constant 9.210240e+00 : f32
    %60 = vector.broadcast %cst_14 : f32 to vector<16x128xf32>
    %61 = arith.maximumf %60, %45 : vector<16x128xf32>
    %62 = vector.broadcast %cst_15 : f32 to vector<16x128xf32>
    %63 = arith.minimumf %62, %61 : vector<16x128xf32>
    %cst_16 = arith.constant 9.99999974E-5 : f32
    %cst_17 = arith.constant 0.999899983 : f32
    %64 = vector.broadcast %cst_16 : f32 to vector<16x128xf32>
    %65 = arith.maximumf %64, %55 : vector<16x128xf32>
    %66 = vector.broadcast %cst_17 : f32 to vector<16x128xf32>
    %67 = arith.minimumf %66, %65 : vector<16x128xf32>
    %68 = math.absf %63 : vector<16x128xf32>
    %cst_18 = arith.constant 0.000000e+00 : f32
    %69 = vector.broadcast %cst_18 : f32 to vector<16x128xf32>
    %70 = arith.subf %69, %68 : vector<16x128xf32>
    %71 = math.exp %70 : vector<16x128xf32>
    %cst_19 = arith.constant 1.000000e+00 : f32
    %72 = vector.broadcast %cst_19 : f32 to vector<16x128xf32>
    %73 = arith.addf %72, %71 : vector<16x128xf32>
    %74 = math.log %73 : vector<16x128xf32>
    %cst_20 = arith.constant 0.000000e+00 : f32
    %75 = vector.broadcast %cst_20 : f32 to vector<16x128xf32>
    %76 = arith.maximumf %63, %75 : vector<16x128xf32>
    %77 = arith.addf %74, %76 : vector<16x128xf32>
    %78 = arith.mulf %67, %63 : vector<16x128xf32>
    %79 = arith.subf %77, %78 : vector<16x128xf32>
    %cst_21 = arith.constant 0.000000e+00 : f32
    %80 = vector.broadcast %cst_21 : f32 to vector<16x128xf32>
    %81 = arith.select %59, %79, %80 : vector<16x128xi1>, vector<16x128xf32>
    %82 = arith.minimumf %41, %51 : vector<16x128xf32>
    %83 = arith.minimumf %37, %47 : vector<16x128xf32>
    %84 = arith.addf %82, %83 : vector<16x128xf32>
    %85 = arith.minimumf %43, %53 : vector<16x128xf32>
    %86 = arith.minimumf %39, %49 : vector<16x128xf32>
    %87 = arith.addf %85, %86 : vector<16x128xf32>
    %88 = arith.mulf %84, %87 : vector<16x128xf32>
    %89 = arith.addf %41, %37 : vector<16x128xf32>
    %90 = arith.addf %43, %39 : vector<16x128xf32>
    %91 = arith.mulf %89, %90 : vector<16x128xf32>
    %92 = arith.addf %51, %47 : vector<16x128xf32>
    %93 = arith.addf %53, %49 : vector<16x128xf32>
    %94 = arith.mulf %92, %93 : vector<16x128xf32>
    %95 = arith.addf %91, %94 : vector<16x128xf32>
    %96 = arith.subf %95, %88 : vector<16x128xf32>
    %cst_22 = arith.constant 9.99999997E-7 : f32
    %97 = vector.broadcast %cst_22 : f32 to vector<16x128xf32>
    %98 = arith.addf %96, %97 : vector<16x128xf32>
    %99 = tpu.reciprocal %98 {approx = true} : vector<16x128xf32> -> vector<16x128xf32>
    %100 = arith.mulf %88, %99 : vector<16x128xf32>
    %cst_23 = arith.constant 1.000000e+00 : f32
    %101 = vector.broadcast %cst_23 : f32 to vector<16x128xf32>
    %102 = arith.select %59, %100, %101 : vector<16x128xi1>, vector<16x128xf32>
    %103 = math.log %102 : vector<16x128xf32>
    %cst_24 = arith.constant 0.000000e+00 : f32
    %104 = vector.broadcast %cst_24 : f32 to vector<16x128xf32>
    %105 = arith.subf %104, %103 : vector<16x128xf32>
    %c0_25 = arith.constant 0 : index
    %c0_26 = arith.constant 0 : index
    %c0_27 = arith.constant 0 : index
    %106 = vector.load %arg5[%c0_25, %c0_26, %c0_27] : memref<1x4x128xf32, #tpu.memory_space<vmem>>, vector<1x1x128xf32>
    %107 = vector.shape_cast %106 : vector<1x1x128xf32> to vector<1x128xf32>
    %cst_28 = arith.constant dense<0.000000e+00> : vector<128xf32>
    %108 = vector.multi_reduction <add>, %34, %cst_28 [0] : vector<128x128xf32> to vector<128xf32>
    %109 = vector.shape_cast %108 : vector<128xf32> to vector<1x128xf32>
    %110 = arith.addf %107, %109 : vector<1x128xf32>
    %c0_29 = arith.constant 0 : index
    %c0_30 = arith.constant 0 : index
    %c0_31 = arith.constant 0 : index
    %111 = vector.load %arg5[%c0_29, %c0_30, %c0_31] : memref<1x4x128xf32, #tpu.memory_space<vmem>>, vector<1x1x128xf32>
    %112 = vector.shape_cast %111 : vector<1x1x128xf32> to vector<1x128xf32>
    %113 = vector.shape_cast %110 : vector<1x128xf32> to vector<1x1x128xf32>
    tpu.vector_store %arg5[%c0_29, %c0_30, %c0_31], %113 {strides = array<i32>} : memref<1x4x128xf32, #tpu.memory_space<vmem>>, vector<1x1x128xf32>,
    %c0_32 = arith.constant 0 : index
    %c1 = arith.constant 1 : index
    %c0_33 = arith.constant 0 : index
    %114 = vector.load %arg5[%c0_32, %c1, %c0_33] : memref<1x4x128xf32, #tpu.memory_space<vmem>>, vector<1x1x128xf32>
    %115 = vector.shape_cast %114 : vector<1x1x128xf32> to vector<1x128xf32>
    %cst_34 = arith.constant dense<0.000000e+00> : vector<128xf32>
    %116 = vector.multi_reduction <add>, %81, %cst_34 [0] : vector<16x128xf32> to vector<128xf32>
    %117 = vector.shape_cast %116 : vector<128xf32> to vector<1x128xf32>
    %118 = arith.addf %115, %117 : vector<1x128xf32>
    %c0_35 = arith.constant 0 : index
    %c1_36 = arith.constant 1 : index
    %c0_37 = arith.constant 0 : index
    %119 = vector.load %arg5[%c0_35, %c1_36, %c0_37] : memref<1x4x128xf32, #tpu.memory_space<vmem>>, vector<1x1x128xf32>
    %120 = vector.shape_cast %119 : vector<1x1x128xf32> to vector<1x128xf32>
    %121 = vector.shape_cast %118 : vector<1x128xf32> to vector<1x1x128xf32>
    tpu.vector_store %arg5[%c0_35, %c1_36, %c0_37], %121 {strides = array<i32>} : memref<1x4x128xf32, #tpu.memory_space<vmem>>, vector<1x1x128xf32>,
    %c0_38 = arith.constant 0 : index
    %c2 = arith.constant 2 : index
    %c0_39 = arith.constant 0 : index
    %122 = vector.load %arg5[%c0_38, %c2, %c0_39] : memref<1x4x128xf32, #tpu.memory_space<vmem>>, vector<1x1x128xf32>
    %123 = vector.shape_cast %122 : vector<1x1x128xf32> to vector<1x128xf32>
    %cst_40 = arith.constant dense<0.000000e+00> : vector<128xf32>
    %124 = vector.multi_reduction <add>, %105, %cst_40 [0] : vector<16x128xf32> to vector<128xf32>
    %125 = vector.shape_cast %124 : vector<128xf32> to vector<1x128xf32>
    %126 = arith.addf %123, %125 : vector<1x128xf32>
    %c0_41 = arith.constant 0 : index
    %c2_42 = arith.constant 2 : index
    %c0_43 = arith.constant 0 : index
    %127 = vector.load %arg5[%c0_41, %c2_42, %c0_43] : memref<1x4x128xf32, #tpu.memory_space<vmem>>, vector<1x1x128xf32>
    %128 = vector.shape_cast %127 : vector<1x1x128xf32> to vector<1x128xf32>
    %129 = vector.shape_cast %126 : vector<1x128xf32> to vector<1x1x128xf32>
    tpu.vector_store %arg5[%c0_41, %c2_42, %c0_43], %129 {strides = array<i32>} : memref<1x4x128xf32, #tpu.memory_space<vmem>>, vector<1x1x128xf32>,
    %c0_44 = arith.constant 0 : index
    %c3 = arith.constant 3 : index
    %c0_45 = arith.constant 0 : index
    %130 = vector.load %arg5[%c0_44, %c3, %c0_45] : memref<1x4x128xf32, #tpu.memory_space<vmem>>, vector<1x1x128xf32>
    %131 = vector.shape_cast %130 : vector<1x1x128xf32> to vector<1x128xf32>
    %cst_46 = arith.constant dense<0.000000e+00> : vector<128xf32>
    %132 = vector.multi_reduction <add>, %57, %cst_46 [0] : vector<16x128xf32> to vector<128xf32>
    %133 = vector.shape_cast %132 : vector<128xf32> to vector<1x128xf32>
    %134 = arith.addf %131, %133 : vector<1x128xf32>
    %c0_47 = arith.constant 0 : index
    %c3_48 = arith.constant 3 : index
    %c0_49 = arith.constant 0 : index
    %135 = vector.load %arg5[%c0_47, %c3_48, %c0_49] : memref<1x4x128xf32, #tpu.memory_space<vmem>>, vector<1x1x128xf32>
    %136 = vector.shape_cast %135 : vector<1x1x128xf32> to vector<1x128xf32>
    %137 = vector.shape_cast %134 : vector<1x128xf32> to vector<1x1x128xf32>
    tpu.vector_store %arg5[%c0_47, %c3_48, %c0_49], %137 {strides = array<i32>} : memref<1x4x128xf32, #tpu.memory_space<vmem>>, vector<1x1x128xf32>,
    return
  }
  func.func @transform_0(%arg0: i32, %arg1: i32) -> (i32, i32) {
    %c1_i32 = arith.constant 1 : i32
    %0 = arith.muli %arg0, %c1_i32 : i32
    %1 = arith.addi %0, %arg1 : i32
    %c0_i32 = arith.constant 0 : i32
    %c0_i32_0 = arith.constant 0 : i32
    return %1, %c0_i32 : i32, i32
  }
  func.func @transform_1(%arg0: i32, %arg1: i32) -> (i32, i32) {
    %c1_i32 = arith.constant 1 : i32
    %0 = arith.muli %arg0, %c1_i32 : i32
    %1 = arith.addi %0, %arg1 : i32
    %c0_i32 = arith.constant 0 : i32
    %c0_i32_0 = arith.constant 0 : i32
    return %1, %c0_i32 : i32, i32
  }
  func.func @transform_2(%arg0: i32, %arg1: i32) -> (i32, i32, i32) {
    %c1_i32 = arith.constant 1 : i32
    %0 = arith.muli %arg0, %c1_i32 : i32
    %1 = arith.addi %0, %arg1 : i32
    %c0_i32 = arith.constant 0 : i32
    %c0_i32_0 = arith.constant 0 : i32
    %c0_i32_1 = arith.constant 0 : i32
    return %c0_i32, %1, %c0_i32_0 : i32, i32, i32
  }
  func.func @transform_3(%arg0: i32, %arg1: i32) -> (i32, i32, i32) {
    %c0_i32 = arith.constant 0 : i32
    %c0_i32_0 = arith.constant 0 : i32
    %c0_i32_1 = arith.constant 0 : i32
    return %arg0, %c0_i32, %c0_i32_0 : i32, i32, i32
  }
}

</mosaic_0001>

<llo_original>
// kernel: tpu_custom_call.1
$region0: #{tpu_custom_call.1}
  #allocation0 [shape = 'u32[]', space=smem, size = 0x4, offset = 0x4, fixed_abs, tag = 'smem constant byte address 0x4 - core index']
  #allocation1 [shape = 'u32[72,128]{1,0:T(1,128)}', space=vmem, size = 0x9000, scoped, tag = 'internal scratch']
  #allocation9 [shape = 's32[]', space=sflag, size = 0x4, offset = 0, fixed_abs, tag = 'sflag constant byte address 0x0 - dummy sync flag']
  %s0 = inlined_call_operand.hbm [shape: f32[256,128], index: 0, kind: input, shape index: {}]
  %s1 = inlined_call_operand.hbm [shape: f32[256,128], index: 1, kind: input, shape index: {}]
  %s2 = inlined_call_operand.hbm [shape: f32[11,32,128], index: 2, kind: input, shape index: {}]
  %s3 = inlined_call_operand.hbm [shape: f32[2,4,128], index: 3, kind: output, shape index: {}]
  %s4 = sld [smem:[#allocation0]]
  $region61: #{tpu_custom_call.1} parent=0
    _
  %s6 = ssub.s32 1, %s4
  %s7 = scalar_select 0, %s6, %s4
  $region1: #{tpu_custom_call.1} parent=0
    #allocation2 [shape = 'u8[131072]{0}', space=vmem, size = 0x20000, scoped, tag = 'input window, operand 0']
    #allocation3 [shape = 's32[2]{0}', space=sflag, size = 0x8, scoped, tag = 'scoped memory for tpu_custom_call.1']
    #allocation4 [shape = 's32[2]{0}', space=sflag, size = 0x8, scoped, tag = 'scoped memory for tpu_custom_call.1']
    #allocation5 [shape = 'u8[131072]{0}', space=vmem, size = 0x20000, scoped, tag = 'input window, operand 1']
    #allocation6 [shape = 's32[2]{0}', space=sflag, size = 0x8, scoped, tag = 'scoped memory for tpu_custom_call.1']
    #allocation7 [shape = 'u8[180224]{0}', space=vmem, size = 0x2c000, scoped, tag = 'input window, operand 2']
    #allocation8 [shape = 'u8[4096]{0}', space=vmem, size = 0x1000, scoped, tag = 'output window, operand 0']
    %8 = vsyncpa [#allocation3], 0
    %s9 = scalar_lea.sflag [#allocation3], 1
    %10 = vsyncpa %s9, 0
    %11 = vsyncpa [#allocation6], 0
    %s12 = scalar_lea.sflag [#allocation6], 1
    %13 = vsyncpa %s12, 0
    %14 = vsyncpa [#allocation4], 0
    %s15 = scalar_lea.sflag [#allocation4], 1
    %16 = vsyncpa %s15, 0
    loop: start=0, step=1, limit=4
    $region2: #{tpu_custom_call.1} parent=1 // loop_pre_header
      _
    $region3: #{tpu_custom_call.1} parent=1 // loop_header
      %s18 = sphi 0, %s22
      %p19 = scmp.ge.s32.totalorder %s18, 4
      %s25 = sphi 0, %s37
      %s26 = sphi 0, %s33
      %s27 = sphi 0, %s25
      %s28 = sphi 0, %s26
      %s29 = sphi 0, %s27
      %s30 = sphi 0, %s28
      %s42 = sphi 0, %s44
      %s45 = sphi 0, %s42
      %s46 = sphi 0, %s45
      %s62 = sphi 0, %s46
      %s70 = sphi 0, %s72
      %s73 = sphi 0, %s70
      %s74 = sphi 0, %s73
      %s90 = sphi 0, %s74
      %s98 = sphi 0, %s100
      %s101 = sphi 0, %s98
      %s102 = sphi 0, %s101
      %s118 = sphi 0, %s102
      %s124 = sphi 0, %s126
      %s127 = sphi 0, %s124
      %s128 = sphi 0, %s127
      %s144 = sphi 0, %s128
    $region4: #{tpu_custom_call.1} parent=1 // loop_header_branch
      %21 = sbr.rel (%p19) target = $region8
    $region5: #{tpu_custom_call.1} parent=1 // loop_body
      %s23 = ssub.s32 %s18, 1
      %s24 = ssub.s32 %s18, 2
      %s31 = sadd.s32 1, %s26
      %p32 = scmp.ge.s32.totalorder %s31, 1
      %s33 = scalar_select %p32, 0, %s31
      %s34 = sadd.s32 1, %s25
      %s35 = scalar_select %p32, %s34, %s25
      %p36 = scmp.ge.s32.totalorder %s35, 2
      %s37 = scalar_select %p36, 0, %s35
      %s38 = sadd.s32 %s25, %s26
      %s39 = sadd.s32 %s37, %s33
      %s40 = ssub.s32 %s38, %s39
      %p41 = scmp.eq.s32.totalorder %s40, 0
      %s43 = sadd.s32 %s42, 1
      %s44 = scalar_select %p41, %s42, %s43
      %p47 = pneg %p41
      %p48 = scmp.eq.s32.totalorder %s18, 1
      %p49 = por %p47, %p48
      %p50 = scmp.ne.s32.totalorder %s42, %s45
      %p51 = scmp.eq.s32.totalorder %s18, 0
      %p52 = por %p50, %p51
      %p53 = scmp.ne.s32.totalorder %s42, %s45
      %p54 = scmp.eq.s32.totalorder %s23, 1
      %p55 = por %p53, %p54
      %p56 = scmp.ne.s32.totalorder %s45, %s46
      %p57 = scmp.eq.s32.totalorder %s23, 0
      %p58 = por %p56, %p57
      %p59 = scmp.ne.s32.totalorder %s45, %s46
      %p60 = scmp.eq.s32.totalorder %s24, 1
      %p61 = por %p59, %p60
      %p63 = scmp.ne.s32.totalorder %s46, %s62
      %p64 = scmp.eq.s32.totalorder %s24, 0
      %p65 = por %p63, %p64
      %s66 = sadd.s32 %s25, %s26
      %s67 = sadd.s32 %s37, %s33
      %s68 = ssub.s32 %s66, %s67
      %p69 = scmp.eq.s32.totalorder %s68, 0
      %s71 = sadd.s32 %s70, 1
      %s72 = scalar_select %p69, %s70, %s71
      %p75 = pneg %p69
      %p76 = scmp.eq.s32.totalorder %s18, 1
      %p77 = por %p75, %p76
      %p78 = scmp.ne.s32.totalorder %s70, %s73
      %p79 = scmp.eq.s32.totalorder %s18, 0
      %p80 = por %p78, %p79
      %p81 = scmp.ne.s32.totalorder %s70, %s73
      %p82 = scmp.eq.s32.totalorder %s23, 1
      %p83 = por %p81, %p82
      %p84 = scmp.ne.s32.totalorder %s73, %s74
      %p85 = scmp.eq.s32.totalorder %s23, 0
      %p86 = por %p84, %p85
      %p87 = scmp.ne.s32.totalorder %s73, %s74
      %p88 = scmp.eq.s32.totalorder %s24, 1
      %p89 = por %p87, %p88
      %p91 = scmp.ne.s32.totalorder %s74, %s90
      %p92 = scmp.eq.s32.totalorder %s24, 0
      %p93 = por %p91, %p92
      %s94 = sadd.s32 %s25, %s26
      %s95 = sadd.s32 %s37, %s33
      %s96 = ssub.s32 %s94, %s95
      %p97 = scmp.eq.s32.totalorder %s96, 0
      %s99 = sadd.s32 %s98, 1
      %s100 = scalar_select %p97, %s98, %s99
      %p103 = pneg %p97
      %p104 = scmp.eq.s32.totalorder %s18, 1
      %p105 = por %p103, %p104
      %p106 = scmp.ne.s32.totalorder %s98, %s101
      %p107 = scmp.eq.s32.totalorder %s18, 0
      %p108 = por %p106, %p107
      %p109 = scmp.ne.s32.totalorder %s98, %s101
      %p110 = scmp.eq.s32.totalorder %s23, 1
      %p111 = por %p109, %p110
      %p112 = scmp.ne.s32.totalorder %s101, %s102
      %p113 = scmp.eq.s32.totalorder %s23, 0
      %p114 = por %p112, %p113
      %p115 = scmp.ne.s32.totalorder %s101, %s102
      %p116 = scmp.eq.s32.totalorder %s24, 1
      %p117 = por %p115, %p116
      %p119 = scmp.ne.s32.totalorder %s102, %s118
      %p120 = scmp.eq.s32.totalorder %s24, 0
      %p121 = por %p119, %p120
      %s122 = ssub.s32 %s25, %s37
      %p123 = scmp.eq.s32.totalorder %s122, 0
      %s125 = sadd.s32 %s124, 1
      %s126 = scalar_select %p123, %s124, %s125
      %p129 = pneg %p123
      %p130 = scmp.eq.s32.totalorder %s18, 1
      %p131 = por %p129, %p130
      %p132 = scmp.ne.s32.totalorder %s124, %s127
      %p133 = scmp.eq.s32.totalorder %s18, 0
      %p134 = por %p132, %p133
      %p135 = scmp.ne.s32.totalorder %s124, %s127
      %p136 = scmp.eq.s32.totalorder %s23, 1
      %p137 = por %p135, %p136
      %p138 = scmp.ne.s32.totalorder %s127, %s128
      %p139 = scmp.eq.s32.totalorder %s23, 0
      %p140 = por %p138, %p139
      %p141 = scmp.ne.s32.totalorder %s127, %s128
      %p142 = scmp.eq.s32.totalorder %s24, 1
      %p143 = por %p141, %p142
      %p145 = scmp.ne.s32.totalorder %s128, %s144
      %p146 = scmp.eq.s32.totalorder %s24, 0
      %p147 = por %p145, %p146
      %p148 = scmp.le.s32.totalorder 1, %s18
      %p149 = scmp.lt.s32.totalorder %s18, 3
      %p150 = pnand %p148, %p149
      %p151 = pneg %p150
      // Predicated region
      $region9: #{tpu_custom_call.1} parent=5 // pred_check
        _
      $region10: #{tpu_custom_call.1} parent=5 // pred_check_branch
        %153 = sbr.rel (%p150) target = $region12
      $region11: #{tpu_custom_call.1} parent=5 // pred_region
        %s154 = ssub.s32 %s18, 1
      $region12: #{tpu_custom_call.1} parent=5 // pred_fallthru
        _
      %p155 = scmp.lt.s32.totalorder %s18, 2
      // Predicated region
      $region13: #{tpu_custom_call.1} parent=5 // pred_check
        %p156 = pneg %p155
      $region14: #{tpu_custom_call.1} parent=5 // pred_check_branch
        %158 = sbr.rel (%p156) target = $region16
      $region15: #{tpu_custom_call.1} parent=5 // pred_region
        // Predicated region
        $region17: #{tpu_custom_call.1} parent=15 // pred_check
          %p159 = pneg %p52
        $region18: #{tpu_custom_call.1} parent=15 // pred_check_branch
          %161 = sbr.rel (%p159) target = $region20
        $region19: #{tpu_custom_call.1} parent=15 // pred_region
          %s162 = sand.u32 %s42, 1
          %s163 = scalar_lea.sflag [#allocation3], %s162
          %s164 = sand.u32 %s42, 1
          %s165 = smul.addr %s164, 128
          %s166 = scalar_lea.vmem [#allocation2], %s165
          %s167 = sadd.s32 %s25, %s26
          %s168 = smul.u32 16, %s167
          %170 = vsyncadd %s163, 0
          %s171 = smul.addr %s168, 8
          %s172 = scalar_lea.hbm %s0, %s171
          %s173 = sshll.u32 %s172, 4
          %s174 = int_to_ptr.hbm [resolvable:$true] %s173
          %s175 = sshll.u32 %s166, 4
          %s176 = int_to_ptr.vmem [resolvable:$true] %s175
          %181 = dma.hbm_to_vmem [thread:$0]  %s174, 2048, %s176, %s163, 128, 128, 8
        $region20: #{tpu_custom_call.1} parent=15 // pred_fallthru
          _
        // Predicated region
        $region21: #{tpu_custom_call.1} parent=15 // pred_check
          %p182 = pneg %p80
        $region22: #{tpu_custom_call.1} parent=15 // pred_check_branch
          %184 = sbr.rel (%p182) target = $region24
        $region23: #{tpu_custom_call.1} parent=15 // pred_region
          %s185 = sand.u32 %s18, 1
          %s186 = scalar_lea.sflag [#allocation6], %s185
          %s187 = sand.u32 %s70, 1
          %s188 = smul.addr %s187, 128
          %s189 = scalar_lea.vmem [#allocation5], %s188
          %s190 = sadd.s32 %s25, %s26
          %s191 = smul.u32 16, %s190
          %193 = vsyncadd %s186, 0
          %s194 = smul.addr %s191, 8
          %s195 = scalar_lea.hbm %s1, %s194
          %s196 = sshll.u32 %s195, 4
          %s197 = int_to_ptr.hbm [resolvable:$true] %s196
          %s198 = sshll.u32 %s189, 4
          %s199 = int_to_ptr.vmem [resolvable:$true] %s198
          %204 = dma.hbm_to_vmem [thread:$0]  %s197, 2048, %s199, %s186, 128, 128, 8
        $region24: #{tpu_custom_call.1} parent=15 // pred_fallthru
          _
        // Predicated region
        $region25: #{tpu_custom_call.1} parent=15 // pred_check
          %p205 = pneg %p108
        $region26: #{tpu_custom_call.1} parent=15 // pred_check_branch
          %207 = sbr.rel (%p205) target = $region28
        $region27: #{tpu_custom_call.1} parent=15 // pred_region
          #allocation10 [shape = 'u32[6]{0}', space=smem, size = 0x18, scoped, tag = 'DMA stride descriptor']
          %s208 = sand.u32 %s18, 1
          %s209 = scalar_lea.sflag [#allocation6], %s208
          %s210 = sand.u32 %s98, 1
          %s211 = smul.addr %s210, 176
          %s212 = scalar_lea.vmem [#allocation7], %s211
          %s213 = sadd.s32 %s25, %s26
          %s214 = smul.u32 2, %s213
          %216 = vsyncadd %s209, 0
          %s217 = smul.addr %s214, 8
          %s218 = scalar_lea.hbm %s2, %s217
          %s220 = sshll.u32 1, 14
          %s221 = sxor.u32 4294967295, %s220
          %s223 = sld [smem:[#allocation0]]
          %s224 = sadd.s32 2, %s223
          %s226 = sshll.u32 7, 26
          %s227 = sxor.u32 4294967295, %s226
          %s228 = sand.u32 0, %s227
          %s229 = sshll.u32 %s224, 26
          %s230 = sor.u32 %s228, %s229
          %s231 = sshll.u32 %s218, 4
          %s232 = int_to_ptr.hbm [resolvable:$true] %s231
          %s233 = sshll.u32 %s212, 4
          %s234 = int_to_ptr.vmem [resolvable:$true] %s233
          %240 = sst [smem:[#allocation10]] 512
          %s241 = scalar_lea.smem [#allocation10], 1
          %242 = sst [smem:[%s241]] 256
          %s243 = scalar_lea.smem [#allocation10], 2
          %244 = sst [smem:[%s243]] 2
          %s245 = scalar_lea.smem [#allocation10], 3
          %246 = sst [smem:[%s245]] 128
          %s247 = scalar_lea.smem [#allocation10], 4
          %248 = sst [smem:[%s247]] 128
          %s249 = scalar_lea.smem [#allocation10], 5
          %250 = sst [smem:[%s249]] 8
          %252 = dma.general %s232, 2816, %s234, %s209, [#allocation9], [#allocation10], %s230, 0
        $region28: #{tpu_custom_call.1} parent=15 // pred_fallthru
          _
      $region16: #{tpu_custom_call.1} parent=5 // pred_fallthru
        _
      %p253 = scmp.le.s32.totalorder 1, %s18
      %p254 = scmp.lt.s32.totalorder %s18, 3
      %p255 = pnand %p253, %p254
      %p256 = pneg %p255
      // Predicated region
      $region29: #{tpu_custom_call.1} parent=5 // pred_check
        _
      $region30: #{tpu_custom_call.1} parent=5 // pred_check_branch
        %258 = sbr.rel (%p255) target = $region32
      $region31: #{tpu_custom_call.1} parent=5 // pred_region
        %s259 = ssub.s32 %s18, 1
        %s260 = sand.u32 %s45, 1
        %s261 = scalar_lea.sflag [#allocation3], %s260
        %s262 = sand.u32 %s45, 1
        %s263 = smul.addr %s262, 128
        %s264 = scalar_lea.vmem [#allocation2], %s263
        // Predicated region
        $region33: #{tpu_custom_call.1} parent=31 // pred_check
          %p265 = pneg %p58
        $region34: #{tpu_custom_call.1} parent=31 // pred_check_branch
          %267 = sbr.rel (%p265) target = $region36
        $region35: #{tpu_custom_call.1} parent=31 // pred_region
          %269 = dma.done %s261, 2048
        $region36: #{tpu_custom_call.1} parent=31 // pred_fallthru
          _
        %s270 = sand.u32 %s23, 1
        %s271 = scalar_lea.sflag [#allocation6], %s270
        %s272 = sand.u32 %s73, 1
        %s273 = smul.addr %s272, 128
        %s274 = scalar_lea.vmem [#allocation5], %s273
        // Predicated region
        $region37: #{tpu_custom_call.1} parent=31 // pred_check
          %p275 = pneg %p86
        $region38: #{tpu_custom_call.1} parent=31 // pred_check_branch
          %277 = sbr.rel (%p275) target = $region40
        $region39: #{tpu_custom_call.1} parent=31 // pred_region
          %279 = dma.done %s271, 2048
        $region40: #{tpu_custom_call.1} parent=31 // pred_fallthru
          _
        %s280 = sand.u32 %s23, 1
        %s281 = scalar_lea.sflag [#allocation6], %s280
        %s282 = sand.u32 %s101, 1
        %s283 = smul.addr %s282, 176
        %s284 = scalar_lea.vmem [#allocation7], %s283
        // Predicated region
        $region41: #{tpu_custom_call.1} parent=31 // pred_check
          %p285 = pneg %p114
        $region42: #{tpu_custom_call.1} parent=31 // pred_check_branch
          %287 = sbr.rel (%p285) target = $region44
        $region43: #{tpu_custom_call.1} parent=31 // pred_region
          %289 = dma.done %s281, 2816
        $region44: #{tpu_custom_call.1} parent=31 // pred_fallthru
          _
        %s290 = sand.u32 %s45, 1
        %s291 = scalar_lea.sflag [#allocation3], %s290
        %s292 = sand.u32 %s45, 1
        %s293 = smul.addr %s292, 128
        %s294 = scalar_lea.vmem [#allocation2], %s293
        %p295 = pneg %p58
        %p296 = pneg %p55
        %s297 = sand.u32 %s23, 1
        %s298 = scalar_lea.sflag [#allocation6], %s297
        %s299 = sand.u32 %s73, 1
        %s300 = smul.addr %s299, 128
        %s301 = scalar_lea.vmem [#allocation5], %s300
        %p302 = pneg %p86
        %p303 = pneg %p83
        %s304 = sand.u32 %s23, 1
        %s305 = scalar_lea.sflag [#allocation6], %s304
        %s306 = sand.u32 %s101, 1
        %s307 = smul.addr %s306, 176
        %s308 = scalar_lea.vmem [#allocation7], %s307
        %p309 = pneg %p114
        %p310 = pneg %p111
        %p311 = pneg %p140
        %p312 = pneg %p137
        %s313 = sand.u32 %s127, 1
        %s314 = scalar_lea.sflag [#allocation4], %s313
        %s315 = sand.u32 %s127, 1
        %s316 = smul.addr %s315, 4
        %s317 = scalar_lea.vmem [#allocation8], %s316
        %s318 = sadd.s32 %s27, %s28
        %s319 = smul.u32 16, %s318
        %s320 = sadd.s32 %s27, %s28
        %s321 = smul.u32 16, %s320
        %s322 = sadd.s32 %s27, %s28
        %s323 = smul.u32 2, %s322
        %p324 = scmp.eq.s32.totalorder %s28, 0
        // Predicated region
        $region45: #{tpu_custom_call.1} parent=31 // pred_check
          %p325 = pneg %p324
        $region46: #{tpu_custom_call.1} parent=31 // pred_check_branch
          %327 = sbr.rel (%p325) target = $region48
        $region47: #{tpu_custom_call.1} parent=31 // pred_region
          %328 = vst [vmem:[%s317] sm:$0xf] 0.0
        $region48: #{tpu_custom_call.1} parent=31 // pred_fallthru
          _
        %v329 = vld [vmem:[%s264] sm:$0xff]
        %v330 = vld [vmem:[%s264 + $0x8] sm:$0xff]
        %v331 = vld [vmem:[%s264 + $0x10] sm:$0xff]
        %v332 = vld [vmem:[%s264 + $0x18] sm:$0xff]
        %v333 = vld [vmem:[%s264 + $0x20] sm:$0xff]
        %v334 = vld [vmem:[%s264 + $0x28] sm:$0xff]
        %v335 = vld [vmem:[%s264 + $0x30] sm:$0xff]
        %v336 = vld [vmem:[%s264 + $0x38] sm:$0xff]
        %v337 = vld [vmem:[%s264 + $0x40] sm:$0xff]
        %v338 = vld [vmem:[%s264 + $0x48] sm:$0xff]
        %v339 = vld [vmem:[%s264 + $0x50] sm:$0xff]
        %v340 = vld [vmem:[%s264 + $0x58] sm:$0xff]
        %v341 = vld [vmem:[%s264 + $0x60] sm:$0xff]
        %v342 = vld [vmem:[%s264 + $0x68] sm:$0xff]
        %v343 = vld [vmem:[%s264 + $0x70] sm:$0xff]
        %v344 = vld [vmem:[%s264 + $0x78] sm:$0xff]
        %v345 = vld [vmem:[%s274] sm:$0xff]
        %v346 = vld [vmem:[%s274 + $0x8] sm:$0xff]
        %v347 = vld [vmem:[%s274 + $0x10] sm:$0xff]
        %v348 = vld [vmem:[%s274 + $0x18] sm:$0xff]
        %v349 = vld [vmem:[%s274 + $0x20] sm:$0xff]
        %v350 = vld [vmem:[%s274 + $0x28] sm:$0xff]
        %v351 = vld [vmem:[%s274 + $0x30] sm:$0xff]
        %v352 = vld [vmem:[%s274 + $0x38] sm:$0xff]
        %v353 = vld [vmem:[%s274 + $0x40] sm:$0xff]
        %v354 = vld [vmem:[%s274 + $0x48] sm:$0xff]
        %v355 = vld [vmem:[%s274 + $0x50] sm:$0xff]
        %v356 = vld [vmem:[%s274 + $0x58] sm:$0xff]
        %v357 = vld [vmem:[%s274 + $0x60] sm:$0xff]
        %v358 = vld [vmem:[%s274 + $0x68] sm:$0xff]
        %v359 = vld [vmem:[%s274 + $0x70] sm:$0xff]
        %v360 = vld [vmem:[%s274 + $0x78] sm:$0xff]
        %v361 = vand.u32 2147483647, %v329
        %v362 = vand.u32 2147483647, %v330
        %v363 = vand.u32 2147483647, %v331
        %v364 = vand.u32 2147483647, %v332
        %v365 = vand.u32 2147483647, %v333
        %v366 = vand.u32 2147483647, %v334
        %v367 = vand.u32 2147483647, %v335
        %v368 = vand.u32 2147483647, %v336
        %v369 = vand.u32 2147483647, %v337
        %v370 = vand.u32 2147483647, %v338
        %v371 = vand.u32 2147483647, %v339
        %v372 = vand.u32 2147483647, %v340
        %v373 = vand.u32 2147483647, %v341
        %v374 = vand.u32 2147483647, %v342
        %v375 = vand.u32 2147483647, %v343
        %v376 = vand.u32 2147483647, %v344
        %v377 = vsub.f32 0.0, %v361
        %v378 = vsub.f32 0.0, %v362
        %v379 = vsub.f32 0.0, %v363
        %v380 = vsub.f32 0.0, %v364
        %v381 = vsub.f32 0.0, %v365
        %v382 = vsub.f32 0.0, %v366
        %v383 = vsub.f32 0.0, %v367
        %v384 = vsub.f32 0.0, %v368
        %v385 = vsub.f32 0.0, %v369
        %v386 = vsub.f32 0.0, %v370
        %v387 = vsub.f32 0.0, %v371
        %v388 = vsub.f32 0.0, %v372
        %v389 = vsub.f32 0.0, %v373
        %v390 = vsub.f32 0.0, %v374
        %v391 = vsub.f32 0.0, %v375
        %v392 = vsub.f32 0.0, %v376
        %v393 = vmul.f32 %v377, 1.442695
        %v394 = vpow.pop %v393
        %v395 = vmul.f32 %v378, 1.442695
        %v396 = vpow.pop %v395
        %v397 = vmul.f32 %v379, 1.442695
        %v398 = vpow.pop %v397
        %v399 = vmul.f32 %v380, 1.442695
        %v400 = vpow.pop %v399
        %v401 = vmul.f32 %v381, 1.442695
        %v402 = vpow.pop %v401
        %v403 = vmul.f32 %v382, 1.442695
        %v404 = vpow.pop %v403
        %v405 = vmul.f32 %v383, 1.442695
        %v406 = vpow.pop %v405
        %v407 = vmul.f32 %v384, 1.442695
        %v408 = vpow.pop %v407
        %v409 = vmul.f32 %v385, 1.442695
        %v410 = vpow.pop %v409
        %v411 = vmul.f32 %v386, 1.442695
        %v412 = vpow.pop %v411
        %v413 = vmul.f32 %v387, 1.442695
        %v414 = vpow.pop %v413
        %v415 = vmul.f32 %v388, 1.442695
        %v416 = vpow.pop %v415
        %v417 = vmul.f32 %v389, 1.442695
        %v418 = vpow.pop %v417
        %v419 = vmul.f32 %v390, 1.442695
        %v420 = vpow.pop %v419
        %v421 = vmul.f32 %v391, 1.442695
        %v422 = vpow.pop %v421
        %v423 = vmul.f32 %v392, 1.442695
        %v424 = vpow.pop %v423
        %v425 = vadd.f32 %v394, 1.0
        %v426 = vadd.f32 %v396, 1.0
        %v427 = vadd.f32 %v398, 1.0
        %v428 = vadd.f32 %v400, 1.0
        %v429 = vadd.f32 %v402, 1.0
        %v430 = vadd.f32 %v404, 1.0
        %v431 = vadd.f32 %v406, 1.0
        %v432 = vadd.f32 %v408, 1.0
        %v433 = vadd.f32 %v410, 1.0
        %v434 = vadd.f32 %v412, 1.0
        %v435 = vadd.f32 %v414, 1.0
        %v436 = vadd.f32 %v416, 1.0
        %v437 = vadd.f32 %v418, 1.0
        %v438 = vadd.f32 %v420, 1.0
        %v439 = vadd.f32 %v422, 1.0
        %v440 = vadd.f32 %v424, 1.0
        %v441 = vlog2.pop %v425
        %v442 = vmul.f32 %v441, 0.6931472
        %v443 = vlog2.pop %v426
        %v444 = vmul.f32 %v443, 0.6931472
        %v445 = vlog2.pop %v427
        %v446 = vmul.f32 %v445, 0.6931472
        %v447 = vlog2.pop %v428
        %v448 = vmul.f32 %v447, 0.6931472
        %v449 = vlog2.pop %v429
        %v450 = vmul.f32 %v449, 0.6931472
        %v451 = vlog2.pop %v430
        %v452 = vmul.f32 %v451, 0.6931472
        %v453 = vlog2.pop %v431
        %v454 = vmul.f32 %v453, 0.6931472
        %v455 = vlog2.pop %v432
        %v456 = vmul.f32 %v455, 0.6931472
        %v457 = vlog2.pop %v433
        %v458 = vmul.f32 %v457, 0.6931472
        %v459 = vlog2.pop %v434
        %v460 = vmul.f32 %v459, 0.6931472
        %v461 = vlog2.pop %v435
        %v462 = vmul.f32 %v461, 0.6931472
        %v463 = vlog2.pop %v436
        %v464 = vmul.f32 %v463, 0.6931472
        %v465 = vlog2.pop %v437
        %v466 = vmul.f32 %v465, 0.6931472
        %v467 = vlog2.pop %v438
        %v468 = vmul.f32 %v467, 0.6931472
        %v469 = vlog2.pop %v439
        %v470 = vmul.f32 %v469, 0.6931472
        %v471 = vlog2.pop %v440
        %v472 = vmul.f32 %v471, 0.6931472
        %v473 = vrcp.pop %v425
        %v474 = vrcp.pop %v426
        %v475 = vrcp.pop %v427
        %v476 = vrcp.pop %v428
        %v477 = vrcp.pop %v429
        %v478 = vrcp.pop %v430
        %v479 = vrcp.pop %v431
        %v480 = vrcp.pop %v432
        %v481 = vrcp.pop %v433
        %v482 = vrcp.pop %v434
        %v483 = vrcp.pop %v435
        %v484 = vrcp.pop %v436
        %v485 = vrcp.pop %v437
        %v486 = vrcp.pop %v438
        %v487 = vrcp.pop %v439
        %v488 = vrcp.pop %v440
        %vm489 = vcmp.ge.f32.partialorder %v329, 0.0
        %vm490 = vcmp.ge.f32.partialorder %v330, 0.0
        %vm491 = vcmp.ge.f32.partialorder %v331, 0.0
        %vm492 = vcmp.ge.f32.partialorder %v332, 0.0
        %vm493 = vcmp.ge.f32.partialorder %v333, 0.0
        %vm494 = vcmp.ge.f32.partialorder %v334, 0.0
        %vm495 = vcmp.ge.f32.partialorder %v335, 0.0
        %vm496 = vcmp.ge.f32.partialorder %v336, 0.0
        %vm497 = vcmp.ge.f32.partialorder %v337, 0.0
        %vm498 = vcmp.ge.f32.partialorder %v338, 0.0
        %vm499 = vcmp.ge.f32.partialorder %v339, 0.0
        %vm500 = vcmp.ge.f32.partialorder %v340, 0.0
        %vm501 = vcmp.ge.f32.partialorder %v341, 0.0
        %vm502 = vcmp.ge.f32.partialorder %v342, 0.0
        %vm503 = vcmp.ge.f32.partialorder %v343, 0.0
        %vm504 = vcmp.ge.f32.partialorder %v344, 0.0
        %v505 = vmul.f32 %v394, %v473
        %v506 = vmul.f32 %v396, %v474
        %v507 = vmul.f32 %v398, %v475
        %v508 = vmul.f32 %v400, %v476
        %v509 = vmul.f32 %v402, %v477
        %v510 = vmul.f32 %v404, %v478
        %v511 = vmul.f32 %v406, %v479
        %v512 = vmul.f32 %v408, %v480
        %v513 = vmul.f32 %v410, %v481
        %v514 = vmul.f32 %v412, %v482
        %v515 = vmul.f32 %v414, %v483
        %v516 = vmul.f32 %v416, %v484
        %v517 = vmul.f32 %v418, %v485
        %v518 = vmul.f32 %v420, %v486
        %v519 = vmul.f32 %v422, %v487
        %v520 = vmul.f32 %v424, %v488
        %v521 = vsel %vm489, %v473, %v505
        %v522 = vsel %vm490, %v474, %v506
        %v523 = vsel %vm491, %v475, %v507
        %v524 = vsel %vm492, %v476, %v508
        %v525 = vsel %vm493, %v477, %v509
        %v526 = vsel %vm494, %v478, %v510
        %v527 = vsel %vm495, %v479, %v511
        %v528 = vsel %vm496, %v480, %v512
        %v529 = vsel %vm497, %v481, %v513
        %v530 = vsel %vm498, %v482, %v514
        %v531 = vsel %vm499, %v483, %v515
        %v532 = vsel %vm500, %v484, %v516
        %v533 = vsel %vm501, %v485, %v517
        %v534 = vsel %vm502, %v486, %v518
        %v535 = vsel %vm503, %v487, %v519
        %v536 = vsel %vm504, %v488, %v520
        %v537 = vsel %vm489, %v505, %v473
        %v538 = vsel %vm490, %v506, %v474
        %v539 = vsel %vm491, %v507, %v475
        %v540 = vsel %vm492, %v508, %v476
        %v541 = vsel %vm493, %v509, %v477
        %v542 = vsel %vm494, %v510, %v478
        %v543 = vsel %vm495, %v511, %v479
        %v544 = vsel %vm496, %v512, %v480
        %v545 = vsel %vm497, %v513, %v481
        %v546 = vsel %vm498, %v514, %v482
        %v547 = vsel %vm499, %v515, %v483
        %v548 = vsel %vm500, %v516, %v484
        %v549 = vsel %vm501, %v517, %v485
        %v550 = vsel %vm502, %v518, %v486
        %v551 = vsel %vm503, %v519, %v487
        %v552 = vsel %vm504, %v520, %v488
        %vm553 = vcmp.eq.f32.partialorder %v345, 1.0
        %vm554 = vcmp.eq.f32.partialorder %v346, 1.0
        %vm555 = vcmp.eq.f32.partialorder %v347, 1.0
        %vm556 = vcmp.eq.f32.partialorder %v348, 1.0
        %vm557 = vcmp.eq.f32.partialorder %v349, 1.0
        %vm558 = vcmp.eq.f32.partialorder %v350, 1.0
        %vm559 = vcmp.eq.f32.partialorder %v351, 1.0
        %vm560 = vcmp.eq.f32.partialorder %v352, 1.0
        %vm561 = vcmp.eq.f32.partialorder %v353, 1.0
        %vm562 = vcmp.eq.f32.partialorder %v354, 1.0
        %vm563 = vcmp.eq.f32.partialorder %v355, 1.0
        %vm564 = vcmp.eq.f32.partialorder %v356, 1.0
        %vm565 = vcmp.eq.f32.partialorder %v357, 1.0
        %vm566 = vcmp.eq.f32.partialorder %v358, 1.0
        %vm567 = vcmp.eq.f32.partialorder %v359, 1.0
        %vm568 = vcmp.eq.f32.partialorder %v360, 1.0
        %v569 = vsel %vm553, %v537, %v521
        %v570 = vsel %vm554, %v538, %v522
        %v571 = vsel %vm555, %v539, %v523
        %v572 = vsel %vm556, %v540, %v524
        %v573 = vsel %vm557, %v541, %v525
        %v574 = vsel %vm558, %v542, %v526
        %v575 = vsel %vm559, %v543, %v527
        %v576 = vsel %vm560, %v544, %v528
        %v577 = vsel %vm561, %v545, %v529
        %v578 = vsel %vm562, %v546, %v530
        %v579 = vsel %vm563, %v547, %v531
        %v580 = vsel %vm564, %v548, %v532
        %v581 = vsel %vm565, %v549, %v533
        %v582 = vsel %vm566, %v550, %v534
        %v583 = vsel %vm567, %v551, %v535
        %v584 = vsel %vm568, %v552, %v536
        %v585 = vsel %vm489, 1, 0
        %v586 = vsel %vm490, 1, 0
        %v587 = vsel %vm491, 1, 0
        %v588 = vsel %vm492, 1, 0
        %v589 = vsel %vm493, 1, 0
        %v590 = vsel %vm494, 1, 0
        %v591 = vsel %vm495, 1, 0
        %v592 = vsel %vm496, 1, 0
        %v593 = vsel %vm497, 1, 0
        %v594 = vsel %vm498, 1, 0
        %v595 = vsel %vm499, 1, 0
        %v596 = vsel %vm500, 1, 0
        %v597 = vsel %vm501, 1, 0
        %v598 = vsel %vm502, 1, 0
        %v599 = vsel %vm503, 1, 0
        %v600 = vsel %vm504, 1, 0
        %v601 = vcvt.s32.f32 %v585
        %v602 = vcvt.s32.f32 %v586
        %v603 = vcvt.s32.f32 %v587
        %v604 = vcvt.s32.f32 %v588
        %v605 = vcvt.s32.f32 %v589
        %v606 = vcvt.s32.f32 %v590
        %v607 = vcvt.s32.f32 %v591
        %v608 = vcvt.s32.f32 %v592
        %v609 = vcvt.s32.f32 %v593
        %v610 = vcvt.s32.f32 %v594
        %v611 = vcvt.s32.f32 %v595
        %v612 = vcvt.s32.f32 %v596
        %v613 = vcvt.s32.f32 %v597
        %v614 = vcvt.s32.f32 %v598
        %v615 = vcvt.s32.f32 %v599
        %v616 = vcvt.s32.f32 %v600
        %v617 = vsub.f32 %v601, %v345
        %v618 = vsub.f32 %v602, %v346
        %v619 = vsub.f32 %v603, %v347
        %v620 = vsub.f32 %v604, %v348
        %v621 = vsub.f32 %v605, %v349
        %v622 = vsub.f32 %v606, %v350
        %v623 = vsub.f32 %v607, %v351
        %v624 = vsub.f32 %v608, %v352
        %v625 = vsub.f32 %v609, %v353
        %v626 = vsub.f32 %v610, %v354
        %v627 = vsub.f32 %v611, %v355
        %v628 = vsub.f32 %v612, %v356
        %v629 = vsub.f32 %v613, %v357
        %v630 = vsub.f32 %v614, %v358
        %v631 = vsub.f32 %v615, %v359
        %v632 = vsub.f32 %v616, %v360
        %v633 = vmul.f32 %v329, %v617
        %v634 = vmul.f32 %v330, %v618
        %v635 = vmul.f32 %v331, %v619
        %v636 = vmul.f32 %v332, %v620
        %v637 = vmul.f32 %v333, %v621
        %v638 = vmul.f32 %v334, %v622
        %v639 = vmul.f32 %v335, %v623
        %v640 = vmul.f32 %v336, %v624
        %v641 = vmul.f32 %v337, %v625
        %v642 = vmul.f32 %v338, %v626
        %v643 = vmul.f32 %v339, %v627
        %v644 = vmul.f32 %v340, %v628
        %v645 = vmul.f32 %v341, %v629
        %v646 = vmul.f32 %v342, %v630
        %v647 = vmul.f32 %v343, %v631
        %v648 = vmul.f32 %v344, %v632
        %v649 = vadd.f32 %v442, %v633
        %v650 = vadd.f32 %v444, %v634
        %v651 = vadd.f32 %v446, %v635
        %v652 = vadd.f32 %v448, %v636
        %v653 = vadd.f32 %v450, %v637
        %v654 = vadd.f32 %v452, %v638
        %v655 = vadd.f32 %v454, %v639
        %v656 = vadd.f32 %v456, %v640
        %v657 = vadd.f32 %v458, %v641
        %v658 = vadd.f32 %v460, %v642
        %v659 = vadd.f32 %v462, %v643
        %v660 = vadd.f32 %v464, %v644
        %v661 = vadd.f32 %v466, %v645
        %v662 = vadd.f32 %v468, %v646
        %v663 = vadd.f32 %v470, %v647
        %v664 = vadd.f32 %v472, %v648
        %v665 = vmul.f32 %v345, 0.5
        %v666 = vmul.f32 %v346, 0.5
        %v667 = vmul.f32 %v347, 0.5
        %v668 = vmul.f32 %v348, 0.5
        %v669 = vmul.f32 %v349, 0.5
        %v670 = vmul.f32 %v350, 0.5
        %v671 = vmul.f32 %v351, 0.5
        %v672 = vmul.f32 %v352, 0.5
        %v673 = vmul.f32 %v353, 0.5
        %v674 = vmul.f32 %v354, 0.5
        %v675 = vmul.f32 %v355, 0.5
        %v676 = vmul.f32 %v356, 0.5
        %v677 = vmul.f32 %v357, 0.5
        %v678 = vmul.f32 %v358, 0.5
        %v679 = vmul.f32 %v359, 0.5
        %v680 = vmul.f32 %v360, 0.5
        %v681 = vsub.f32 0.75, %v665
        %v682 = vsub.f32 0.75, %v666
        %v683 = vsub.f32 0.75, %v667
        %v684 = vsub.f32 0.75, %v668
        %v685 = vsub.f32 0.75, %v669
        %v686 = vsub.f32 0.75, %v670
        %v687 = vsub.f32 0.75, %v671
        %v688 = vsub.f32 0.75, %v672
        %v689 = vsub.f32 0.75, %v673
        %v690 = vsub.f32 0.75, %v674
        %v691 = vsub.f32 0.75, %v675
        %v692 = vsub.f32 0.75, %v676
        %v693 = vsub.f32 0.75, %v677
        %v694 = vsub.f32 0.75, %v678
        %v695 = vsub.f32 0.75, %v679
        %v696 = vsub.f32 0.75, %v680
        %v697 = vmul.f32 %v569, %v569
        %v698 = vmul.f32 %v570, %v570
        %v699 = vmul.f32 %v571, %v571
        %v700 = vmul.f32 %v572, %v572
        %v701 = vmul.f32 %v573, %v573
        %v702 = vmul.f32 %v574, %v574
        %v703 = vmul.f32 %v575, %v575
        %v704 = vmul.f32 %v576, %v576
        %v705 = vmul.f32 %v577, %v577
        %v706 = vmul.f32 %v578, %v578
        %v707 = vmul.f32 %v579, %v579
        %v708 = vmul.f32 %v580, %v580
        %v709 = vmul.f32 %v581, %v581
        %v710 = vmul.f32 %v582, %v582
        %v711 = vmul.f32 %v583, %v583
        %v712 = vmul.f32 %v584, %v584
        %v713 = vmul.f32 %v681, %v697
        %v714 = vmul.f32 %v682, %v698
        %v715 = vmul.f32 %v683, %v699
        %v716 = vmul.f32 %v684, %v700
        %v717 = vmul.f32 %v685, %v701
        %v718 = vmul.f32 %v686, %v702
        %v719 = vmul.f32 %v687, %v703
        %v720 = vmul.f32 %v688, %v704
        %v721 = vmul.f32 %v689, %v705
        %v722 = vmul.f32 %v690, %v706
        %v723 = vmul.f32 %v691, %v707
        %v724 = vmul.f32 %v692, %v708
        %v725 = vmul.f32 %v693, %v709
        %v726 = vmul.f32 %v694, %v710
        %v727 = vmul.f32 %v695, %v711
        %v728 = vmul.f32 %v696, %v712
        %v729 = vmul.f32 %v713, %v649
        %v730 = vmul.f32 %v714, %v650
        %v731 = vmul.f32 %v715, %v651
        %v732 = vmul.f32 %v716, %v652
        %v733 = vmul.f32 %v717, %v653
        %v734 = vmul.f32 %v718, %v654
        %v735 = vmul.f32 %v719, %v655
        %v736 = vmul.f32 %v720, %v656
        %v737 = vmul.f32 %v721, %v657
        %v738 = vmul.f32 %v722, %v658
        %v739 = vmul.f32 %v723, %v659
        %v740 = vmul.f32 %v724, %v660
        %v741 = vmul.f32 %v725, %v661
        %v742 = vmul.f32 %v726, %v662
        %v743 = vmul.f32 %v727, %v663
        %v744 = vmul.f32 %v728, %v664
        %v745 = vld [vmem:[%s284] sm:$0xff]
        %v746 = vld [vmem:[%s284 + $0x8] sm:$0xff]
        %v747 = vld [vmem:[%s284 + $0x10] sm:$0xff]
        %v748 = vld [vmem:[%s284 + $0x18] sm:$0xff]
        %v749 = vld [vmem:[%s284 + $0x20] sm:$0xff]
        %v750 = vld [vmem:[%s284 + $0x28] sm:$0xff]
        %v751 = vld [vmem:[%s284 + $0x30] sm:$0xff]
        %v752 = vld [vmem:[%s284 + $0x38] sm:$0xff]
        %v753 = vld [vmem:[%s284 + $0x40] sm:$0xff]
        %v754 = vld [vmem:[%s284 + $0x48] sm:$0xff]
        %v755 = vld [vmem:[%s284 + $0x50] sm:$0xff]
        %v756 = vld [vmem:[%s284 + $0x58] sm:$0xff]
        %v757 = vld [vmem:[%s284 + $0x60] sm:$0xff]
        %v758 = vld [vmem:[%s284 + $0x68] sm:$0xff]
        %v759 = vld [vmem:[%s284 + $0x70] sm:$0xff]
        %v760 = vld [vmem:[%s284 + $0x78] sm:$0xff]
        %v761 = vld [vmem:[%s284 + $0x80] sm:$0xff]
        %v762 = vld [vmem:[%s284 + $0x88] sm:$0xff]
        %v763 = vld [vmem:[%s284 + $0x90] sm:$0xff]
        %v764 = vld [vmem:[%s284 + $0x98] sm:$0xff]
        %v765 = vld [vmem:[%s284 + $0xa0] sm:$0xff]
        %v766 = vld [vmem:[%s284 + $0xa8] sm:$0xff]
        %vm767 = vcmp.gt.f32.partialorder %v765, 0.0
        %vm768 = vcmp.gt.f32.partialorder %v766, 0.0
        %v769 = vmax.f32 %v753, -9.21024
        %v770 = vmax.f32 %v754, -9.21024
        %v771 = vmin.f32 %v769, 9.21024
        %v772 = vmin.f32 %v770, 9.21024
        %v773 = vmax.f32 %v763, 0.0001
        %v774 = vmax.f32 %v764, 0.0001
        %v775 = vmin.f32 %v773, 0.9999
        %v776 = vmin.f32 %v774, 0.9999
        %v777 = vand.u32 2147483647, %v771
        %v778 = vand.u32 2147483647, %v772
        %v779 = vsub.f32 0.0, %v777
        %v780 = vsub.f32 0.0, %v778
        %v781 = vmul.f32 %v779, 1.442695
        %v782 = vpow.pop %v781
        %v783 = vmul.f32 %v780, 1.442695
        %v784 = vpow.pop %v783
        %v785 = vadd.f32 %v782, 1.0
        %v786 = vadd.f32 %v784, 1.0
        %v787 = vlog2.pop %v785
        %v788 = vmul.f32 %v787, 0.6931472
        %v789 = vlog2.pop %v786
        %v790 = vmul.f32 %v789, 0.6931472
        %v791 = vmax.f32 %v771, 0.0
        %v792 = vmax.f32 %v772, 0.0
        %v793 = vadd.f32 %v788, %v791
        %v794 = vadd.f32 %v790, %v792
        %v795 = vmul.f32 %v775, %v771
        %v796 = vmul.f32 %v776, %v772
        %v797 = vsub.f32 %v793, %v795
        %v798 = vsub.f32 %v794, %v796
        %v799 = vsel %vm767, %v797, 0.0
        %v800 = vsel %vm768, %v798, 0.0
        %v801 = vmin.f32 %v749, %v759
        %v802 = vmin.f32 %v750, %v760
        %v803 = vmin.f32 %v745, %v755
        %v804 = vmin.f32 %v746, %v756
        %v805 = vadd.f32 %v801, %v803
        %v806 = vadd.f32 %v802, %v804
        %v807 = vmin.f32 %v751, %v761
        %v808 = vmin.f32 %v752, %v762
        %v809 = vmin.f32 %v747, %v757
        %v810 = vmin.f32 %v748, %v758
        %v811 = vadd.f32 %v807, %v809
        %v812 = vadd.f32 %v808, %v810
        %v813 = vmul.f32 %v805, %v811
        %v814 = vmul.f32 %v806, %v812
        %v815 = vadd.f32 %v749, %v745
        %v816 = vadd.f32 %v750, %v746
        %v817 = vadd.f32 %v751, %v747
        %v818 = vadd.f32 %v752, %v748
        %v819 = vmul.f32 %v815, %v817
        %v820 = vmul.f32 %v816, %v818
        %v821 = vadd.f32 %v759, %v755
        %v822 = vadd.f32 %v760, %v756
        %v823 = vadd.f32 %v761, %v757
        %v824 = vadd.f32 %v762, %v758
        %v825 = vmul.f32 %v821, %v823
        %v826 = vmul.f32 %v822, %v824
        %v827 = vadd.f32 %v819, %v825
        %v828 = vadd.f32 %v820, %v826
        %v829 = vsub.f32 %v827, %v813
        %v830 = vsub.f32 %v828, %v814
        %v831 = vadd.f32 %v829, 1e-06
        %v832 = vadd.f32 %v830, 1e-06
        %v833 = vrcp.pop %v831
        %v834 = vrcp.pop %v832
        %v835 = vmul.f32 %v813, %v833
        %v836 = vmul.f32 %v814, %v834
        %v837 = vsel %vm767, %v835, 1.0
        %v838 = vsel %vm768, %v836, 1.0
        %v839 = vlog2.pop %v837
        %v840 = vmul.f32 %v839, 0.6931472
        %v841 = vlog2.pop %v838
        %v842 = vmul.f32 %v841, 0.6931472
        %v843 = vsub.f32 0.0, %v840
        %v844 = vsub.f32 0.0, %v842
        %v845 = vld [vmem:[%s317] sm:$0x1]
        %v846 = vadd.f32 %v729, %v730
        %v847 = vadd.f32 %v846, %v731
        %v848 = vadd.f32 %v847, %v732
        %v849 = vadd.f32 %v848, %v733
        %v850 = vadd.f32 %v849, %v734
        %v851 = vadd.f32 %v850, %v735
        %v852 = vadd.f32 %v851, %v736
        %v853 = vadd.f32 %v852, %v737
        %v854 = vadd.f32 %v853, %v738
        %v855 = vadd.f32 %v854, %v739
        %v856 = vadd.f32 %v855, %v740
        %v857 = vadd.f32 %v856, %v741
        %v858 = vadd.f32 %v857, %v742
        %v859 = vadd.f32 %v858, %v743
        %v860 = vadd.f32 %v859, %v744
        %v861 = vrot.slane %v860, 4
        %v862 = vadd.f32 %v860, %v861
        %v863 = vrot.slane %v862, 2
        %v864 = vadd.f32 %v862, %v863
        %v865 = vrot.slane %v864, 1
        %v866 = vadd.f32 %v864, %v865
        %v867 = vadd.f32 %v845, %v866
        %868 = vst [vmem:[%s317] sm:$0x1] %v867
        %v869 = vld [vmem:[%s317 + $0x1] sm:$0x1]
        %v870 = vadd.f32 %v799, %v800
        %v871 = vrot.slane %v870, 4
        %v872 = vadd.f32 %v870, %v871
        %v873 = vrot.slane %v872, 2
        %v874 = vadd.f32 %v872, %v873
        %v875 = vrot.slane %v874, 1
        %v876 = vadd.f32 %v874, %v875
        %v877 = vadd.f32 %v869, %v876
        %878 = vst [vmem:[%s317 + $0x1] sm:$0x1] %v877
        %v879 = vld [vmem:[%s317 + $0x2] sm:$0x1]
        %v880 = vadd.f32 %v843, %v844
        %v881 = vrot.slane %v880, 4
        %v882 = vadd.f32 %v880, %v881
        %v883 = vrot.slane %v882, 2
        %v884 = vadd.f32 %v882, %v883
        %v885 = vrot.slane %v884, 1
        %v886 = vadd.f32 %v884, %v885
        %v887 = vadd.f32 %v879, %v886
        %888 = vst [vmem:[%s317 + $0x2] sm:$0x1] %v887
        %v889 = vld [vmem:[%s317 + $0x3] sm:$0x1]
        %v890 = vadd.f32 %v765, %v766
        %v891 = vrot.slane %v890, 4
        %v892 = vadd.f32 %v890, %v891
        %v893 = vrot.slane %v892, 2
        %v894 = vadd.f32 %v892, %v893
        %v895 = vrot.slane %v894, 1
        %v896 = vadd.f32 %v894, %v895
        %v897 = vadd.f32 %v889, %v896
        %898 = vst [vmem:[%s317 + $0x3] sm:$0x1] %v897
        %s899 = sand.u32 %s127, 1
        %s900 = scalar_lea.sflag [#allocation4], %s899
        %s901 = sand.u32 %s127, 1
        %s902 = smul.addr %s901, 4
        %s903 = scalar_lea.vmem [#allocation8], %s902
        // Predicated region
        $region49: #{tpu_custom_call.1} parent=31 // pred_check
          %p904 = pneg %p137
        $region50: #{tpu_custom_call.1} parent=31 // pred_check_branch
          %906 = sbr.rel (%p904) target = $region52
        $region51: #{tpu_custom_call.1} parent=31 // pred_region
          %908 = vsyncadd %s900, 0
          %s909 = smul.addr %s27, 4
          %s910 = scalar_lea.hbm %s3, %s909
          %s912 = sshll.u32 %s903, 4
          %s913 = int_to_ptr.vmem [resolvable:$true] %s912
          %s914 = sshll.u32 %s910, 4
          %s915 = int_to_ptr.hbm [resolvable:$true] %s914
          %917 = dma.vmem_to_hbm [thread:$0]  %s913, 64, %s915, %s900
        $region52: #{tpu_custom_call.1} parent=31 // pred_fallthru
          _
      $region32: #{tpu_custom_call.1} parent=5 // pred_fallthru
        _
      %p918 = scmp.le.s32.totalorder 2, %s18
      // Predicated region
      $region53: #{tpu_custom_call.1} parent=5 // pred_check
        %p919 = pneg %p918
      $region54: #{tpu_custom_call.1} parent=5 // pred_check_branch
        %921 = sbr.rel (%p919) target = $region56
      $region55: #{tpu_custom_call.1} parent=5 // pred_region
        %s922 = ssub.s32 %s18, 2
        // Predicated region
        $region57: #{tpu_custom_call.1} parent=55 // pred_check
          %p923 = pneg %p143
        $region58: #{tpu_custom_call.1} parent=55 // pred_check_branch
          %925 = sbr.rel (%p923) target = $region60
        $region59: #{tpu_custom_call.1} parent=55 // pred_region
          %s926 = sand.u32 %s128, 1
          %s927 = scalar_lea.sflag [#allocation4], %s926
          %s928 = sand.u32 %s128, 1
          %s929 = smul.addr %s928, 4
          %s930 = scalar_lea.vmem [#allocation8], %s929
          %932 = dma.done %s927, 64
        $region60: #{tpu_custom_call.1} parent=55 // pred_fallthru
          _
      $region56: #{tpu_custom_call.1} parent=5 // pred_fallthru
        _
    $region6: #{tpu_custom_call.1} parent=1 // loop_footer
      %s22 = sadd.s32 1, %s18
    $region7: #{tpu_custom_call.1} parent=1 // loop_footer_branch
      %17 = sbr.rel target = $region3
    $region8: #{tpu_custom_call.1} parent=1 // loop_exit
      _
    %933 = vsyncpa [#allocation3], 1
    %s934 = scalar_lea.sflag [#allocation3], 1
    %935 = vsyncpa %s934, 1
    %936 = vsyncpa [#allocation6], 1
    %s937 = scalar_lea.sflag [#allocation6], 1
    %938 = vsyncpa %s937, 1
    %939 = vsyncpa [#allocation4], 1
    %s940 = scalar_lea.sflag [#allocation4], 1
    %941 = vsyncpa %s940, 1

</llo_original>
